<compile_context>
chip_gen: v6e
topology: v6e:2x2x1
jax: 0.10.0
libtpu: 0.0.40
codegen_flags: <defaults>
</compile_context>

<pallas_src>
import jax
import jax.numpy as jnp
from jax.experimental import pallas as pl
from jax.experimental.pallas import tpu as pltpu


def gmm_score_kernel(samp_ref, tdt_ref, out_ref):
    samp = samp_ref[...]            # (B, 8): [x_0..x_{D-1}, meanf, -0.5/s^2, 1/s^2, pad...]
    td = tdt_ref[...]               # (D, N)  train_data^T, N lane-dense

    D = td.shape[0]
    x = samp[:, 0:D]                # (B, D)
    meanf = samp[:, D:D + 1]        # (B, 1)
    neg_half_inv_sig2 = samp[:, D + 1:D + 2]
    inv_sig2 = samp[:, D + 2:D + 3]

    # Hoist each train-data row broadcast once (reused in logit + reduction).
    rows = [td[d:d + 1, :] for d in range(D)]          # D x (1, N)

    # logit = -0.5/sigma^2 * sum_d (x_d - meanf*y_d)^2   (VPU broadcast MACs)
    sq = None
    for d in range(D):
        diff = x[:, d:d + 1] - meanf * rows[d]          # (B, N)
        sq = diff * diff if sq is None else sq + diff * diff
    logits = neg_half_inv_sig2 * sq                     # (B, N)

    # Softmax along the mixture axis (lane axis -> XLU reductions).
    m = jnp.max(logits, axis=1, keepdims=True)
    e = jnp.exp(logits - m)
    denom = jnp.sum(e, axis=1, keepdims=True)           # >= 1
    r = pl.reciprocal(denom, approx=True)               # EUP slot
    r = r * (2.0 - denom * r)                           # one NR step -> f32 accuracy
    w = e * r                                           # (B, N) softmax weights

    # evals_d = meanf * sum_i w_i * y_{i,d}; write each output column directly
    # (no sub-vreg concatenate).  NaN guard keeps parity with the reference
    # when sigma == 0.
    for d in range(D):
        col = jnp.sum(w * rows[d], axis=1, keepdims=True)   # (B, 1) XLU reduce
        ev = meanf * col
        ev = jnp.where(jnp.isnan(ev), jnp.zeros_like(ev), ev)
        out_ref[:, d:d + 1] = (ev - x[:, d:d + 1]) * inv_sig2


def gmm_score(x, train_data, meanf, sigma):
    B, D = x.shape
    N, _ = train_data.shape

    x = x.astype(jnp.float32)
    td_t = train_data.astype(jnp.float32).T              # (D, N), lane-dense

    meanf = meanf.reshape(B, 1).astype(jnp.float32)
    sigma = sigma.reshape(B, 1).astype(jnp.float32)
    inv_sig2 = 1.0 / (sigma * sigma)                     # plain XLA, once

    # Single (B, 8) per-sample slab: one DMA instead of several tiny ones.
    cols = [x, meanf, -0.5 * inv_sig2, inv_sig2]
    used = D + 3
    if used < 8:
        cols.append(jnp.zeros((B, 8 - used), jnp.float32))
    samp = jnp.concatenate(cols, axis=1)                 # (B, 8)

    return pl.pallas_call(
        gmm_score_kernel,
        out_shape=jax.ShapeDtypeStruct((B, D), jnp.float32),
        # No grid: single tile, no pipeline/double-buffer machinery.
        in_specs=[
            pl.BlockSpec(memory_space=pltpu.MemorySpace.VMEM),
            pl.BlockSpec(memory_space=pltpu.MemorySpace.VMEM),
        ],
        out_specs=pl.BlockSpec(memory_space=pltpu.MemorySpace.VMEM),
        cost_estimate=pl.CostEstimate(
            flops=8 * B * N * D,
            transcendentals=B * N,
            bytes_accessed=4 * (B * 8 + D * N + B * D)),
    )(samp, td_t)


# ---- deterministic "module parameters" (ctor args) ---------------------------
BETA_MIN, BETA_MAX = 0.1, 20.0


def marginal_prob_mean(t):
    log_mean_coeff = -0.25 * t ** 2 * (BETA_MAX - BETA_MIN) - 0.5 * t * BETA_MIN
    return jnp.exp(log_mean_coeff)


def marginal_prob_std(t):
    log_mean_coeff = -0.25 * t ** 2 * (BETA_MAX - BETA_MIN) - 0.5 * t * BETA_MIN
    return jnp.sqrt(1.0 - jnp.exp(2.0 * log_mean_coeff))


def gmm_score_ref(x, train_data, meanf, sigma):
    diff = x[:, None, :] - meanf[:, None, None] * train_data[None, :, :]
    logpdf = -0.5 * jnp.sum(diff ** 2, axis=2) / sigma[:, None] ** 2
    w = jax.nn.softmax(logpdf, axis=1)
    evals = meanf[:, None] * (w @ train_data)
    evals = jnp.where(jnp.isnan(evals), 0.0, evals)
    return (evals - x) / sigma[:, None] ** 2


if __name__ == "__main__":
    key = jax.random.PRNGKey(0)
    k_td, k_x, k_t = jax.random.split(key, 3)

    B, D, N = 8, 2, 128   # batch of query points, 2-D points, 128 training points

    # synthetic 2-D GMM training data (two clusters), deterministic
    centers = jnp.array([[2.0, 2.0], [-2.0, -1.0]], jnp.float32)
    assign = (jnp.arange(N) % 2)
    train_data = centers[assign] + 0.3 * jax.random.normal(k_td, (N, D), jnp.float32)

    x = jax.random.normal(k_x, (B, D), jnp.float32)
    t = jax.random.uniform(k_t, (B,), jnp.float32, minval=0.05, maxval=1.0)

    meanf = marginal_prob_mean(t)
    sigma = marginal_prob_std(t)

    out = gmm_score(x, train_data, meanf, sigma)
    out = jax.block_until_ready(out)

    ref = gmm_score_ref(x, train_data, meanf, sigma)
    assert out.shape == (B, D) and out.dtype == jnp.float32
    assert jnp.allclose(out, ref, rtol=1e-4, atol=1e-4), (out, ref)

    print("KERNEL_OK")
</pallas_src>

<mosaic_0001>
module attributes {stable_mosaic.version = 11 : i64} {
  func.func @gmm_score_kernel(%arg0: memref<8x8xf32, #tpu.memory_space<vmem>>, %arg1: memref<2x128xf32, #tpu.memory_space<vmem>>, %arg2: memref<8x2xf32, #tpu.memory_space<vmem>>) attributes {dimension_semantics = [], scalar_prefetch = 0 : i64, scratch_operands = 0 : i64, tpu.core_type = #tpu.core_type<tc>} {
    %c0 = arith.constant 0 : index
    %c0_0 = arith.constant 0 : index
    %0 = vector.load %arg0[%c0, %c0_0] : memref<8x8xf32, #tpu.memory_space<vmem>>, vector<8x8xf32>
    %c0_1 = arith.constant 0 : index
    %c0_2 = arith.constant 0 : index
    %1 = vector.load %arg1[%c0_1, %c0_2] : memref<2x128xf32, #tpu.memory_space<vmem>>, vector<2x128xf32>
    %2 = vector.extract_strided_slice %0 {offsets = [0, 0], sizes = [8, 2], strides = [1, 1]} : vector<8x8xf32> to vector<8x2xf32>
    %3 = vector.extract_strided_slice %0 {offsets = [0, 2], sizes = [8, 1], strides = [1, 1]} : vector<8x8xf32> to vector<8x1xf32>
    %4 = vector.extract_strided_slice %0 {offsets = [0, 3], sizes = [8, 1], strides = [1, 1]} : vector<8x8xf32> to vector<8x1xf32>
    %5 = vector.extract_strided_slice %0 {offsets = [0, 4], sizes = [8, 1], strides = [1, 1]} : vector<8x8xf32> to vector<8x1xf32>
    %6 = vector.extract_strided_slice %1 {offsets = [0, 0], sizes = [1, 128], strides = [1, 1]} : vector<2x128xf32> to vector<1x128xf32>
    %7 = vector.extract_strided_slice %1 {offsets = [1, 0], sizes = [1, 128], strides = [1, 1]} : vector<2x128xf32> to vector<1x128xf32>
    %8 = vector.extract_strided_slice %2 {offsets = [0, 0], sizes = [8, 1], strides = [1, 1]} : vector<8x2xf32> to vector<8x1xf32>
    %9 = vector.broadcast %3 : vector<8x1xf32> to vector<8x128xf32>
    %10 = vector.broadcast %6 : vector<1x128xf32> to vector<8x128xf32>
    %11 = arith.mulf %9, %10 : vector<8x128xf32>
    %12 = vector.broadcast %8 : vector<8x1xf32> to vector<8x128xf32>
    %13 = arith.subf %12, %11 : vector<8x128xf32>
    %14 = arith.mulf %13, %13 : vector<8x128xf32>
    %15 = vector.extract_strided_slice %2 {offsets = [0, 1], sizes = [8, 1], strides = [1, 1]} : vector<8x2xf32> to vector<8x1xf32>
    %16 = vector.broadcast %3 : vector<8x1xf32> to vector<8x128xf32>
    %17 = vector.broadcast %7 : vector<1x128xf32> to vector<8x128xf32>
    %18 = arith.mulf %16, %17 : vector<8x128xf32>
    %19 = vector.broadcast %15 : vector<8x1xf32> to vector<8x128xf32>
    %20 = arith.subf %19, %18 : vector<8x128xf32>
    %21 = arith.mulf %20, %20 : vector<8x128xf32>
    %22 = arith.addf %14, %21 : vector<8x128xf32>
    %23 = vector.broadcast %4 : vector<8x1xf32> to vector<8x128xf32>
    %24 = arith.mulf %23, %22 : vector<8x128xf32>
    %cst = arith.constant dense<0xFF800000> : vector<8xf32>
    %25 = vector.multi_reduction <maximumf>, %24, %cst [1] : vector<8x128xf32> to vector<8xf32>
    %26 = vector.shape_cast %25 : vector<8xf32> to vector<8x1xf32>
    %27 = vector.broadcast %26 : vector<8x1xf32> to vector<8x128xf32>
    %28 = arith.subf %24, %27 : vector<8x128xf32>
    %29 = math.exp %28 : vector<8x128xf32>
    %cst_3 = arith.constant dense<0.000000e+00> : vector<8xf32>
    %30 = vector.multi_reduction <add>, %29, %cst_3 [1] : vector<8x128xf32> to vector<8xf32>
    %31 = vector.shape_cast %30 : vector<8xf32> to vector<8x1xf32>
    %32 = tpu.reciprocal %31 {approx = true} : vector<8x1xf32> -> vector<8x1xf32>
    %33 = arith.mulf %31, %32 : vector<8x1xf32>
    %cst_4 = arith.constant 2.000000e+00 : f32
    %34 = vector.broadcast %cst_4 : f32 to vector<8x1xf32>
    %35 = arith.subf %34, %33 : vector<8x1xf32>
    %36 = arith.mulf %32, %35 : vector<8x1xf32>
    %37 = vector.broadcast %36 : vector<8x1xf32> to vector<8x128xf32>
    %38 = arith.mulf %29, %37 : vector<8x128xf32>
    %39 = vector.broadcast %6 : vector<1x128xf32> to vector<8x128xf32>
    %40 = arith.mulf %38, %39 : vector<8x128xf32>
    %cst_5 = arith.constant dense<0.000000e+00> : vector<8xf32>
    %41 = vector.multi_reduction <add>, %40, %cst_5 [1] : vector<8x128xf32> to vector<8xf32>
    %42 = vector.shape_cast %41 : vector<8xf32> to vector<8x1xf32>
    %43 = arith.mulf %3, %42 : vector<8x1xf32>
    %44 = arith.cmpf one, %43, %43 : vector<8x1xf32>
    %cst_6 = arith.constant 0.000000e+00 : f32
    %45 = vector.broadcast %cst_6 : f32 to vector<8x1xf32>
    %46 = arith.select %44, %45, %43 : vector<8x1xi1>, vector<8x1xf32>
    %47 = vector.extract_strided_slice %2 {offsets = [0, 0], sizes = [8, 1], strides = [1, 1]} : vector<8x2xf32> to vector<8x1xf32>
    %48 = arith.subf %46, %47 : vector<8x1xf32>
    %49 = arith.mulf %48, %5 : vector<8x1xf32>
    %c0_7 = arith.constant 0 : index
    %c0_8 = arith.constant 0 : index
    %50 = vector.load %arg2[%c0_7, %c0_8] : memref<8x2xf32, #tpu.memory_space<vmem>>, vector<8x1xf32>
    tpu.vector_store %arg2[%c0_7, %c0_8], %49 {strides = array<i32>} : memref<8x2xf32, #tpu.memory_space<vmem>>, vector<8x1xf32>,
    %51 = vector.broadcast %7 : vector<1x128xf32> to vector<8x128xf32>
    %52 = arith.mulf %38, %51 : vector<8x128xf32>
    %cst_9 = arith.constant dense<0.000000e+00> : vector<8xf32>
    %53 = vector.multi_reduction <add>, %52, %cst_9 [1] : vector<8x128xf32> to vector<8xf32>
    %54 = vector.shape_cast %53 : vector<8xf32> to vector<8x1xf32>
    %55 = arith.mulf %3, %54 : vector<8x1xf32>
    %56 = arith.cmpf one, %55, %55 : vector<8x1xf32>
    %cst_10 = arith.constant 0.000000e+00 : f32
    %57 = vector.broadcast %cst_10 : f32 to vector<8x1xf32>
    %58 = arith.select %56, %57, %55 : vector<8x1xi1>, vector<8x1xf32>
    %59 = vector.extract_strided_slice %2 {offsets = [0, 1], sizes = [8, 1], strides = [1, 1]} : vector<8x2xf32> to vector<8x1xf32>
    %60 = arith.subf %58, %59 : vector<8x1xf32>
    %61 = arith.mulf %60, %5 : vector<8x1xf32>
    %c0_11 = arith.constant 0 : index
    %c1 = arith.constant 1 : index
    %62 = vector.load %arg2[%c0_11, %c1] : memref<8x2xf32, #tpu.memory_space<vmem>>, vector<8x1xf32>
    tpu.vector_store %arg2[%c0_11, %c1], %61 {strides = array<i32>} : memref<8x2xf32, #tpu.memory_space<vmem>>, vector<8x1xf32>,
    return
  }
}

</mosaic_0001>

<llo_original>
// kernel: tpu_custom_call.1
$region0: #{tpu_custom_call.1}
  #allocation0 [shape = 'u32[]', space=smem, size = 0x4, offset = 0x4, fixed_abs, tag = 'smem constant byte address 0x4 - core index']
  #allocation1 [shape = 'u32[144,128]{1,0:T(1,128)}', space=vmem, size = 0x12000, scoped, tag = 'internal scratch']
  %s0 = inlined_call_operand.hbm [shape: f32[8,8], index: 0, kind: input, shape index: {}]
  %s1 = inlined_call_operand.hbm [shape: f32[2,128], index: 1, kind: input, shape index: {}]
  %s2 = inlined_call_operand.vmem [shape: f32[8,2], index: 2, kind: output, shape index: {}]
  %s3 = sld [smem:[#allocation0]]
  $region26: #{tpu_custom_call.1} parent=0
    _
  %s5 = ssub.s32 1, %s3
  %s6 = scalar_select 0, %s5, %s3
  $region1: #{tpu_custom_call.1} parent=0
    #allocation2 [shape = 'u8[4096]{0}', space=vmem, size = 0x1000, scoped, tag = 'input window, operand 0, single buffered']
    #allocation3 [shape = 's32[1]{0}', space=sflag, size = 0x4, scoped, tag = 'scoped memory for tpu_custom_call.1']
    #allocation4 [shape = 'u8[1024]{0}', space=vmem, size = 0x400, scoped, tag = 'input window, operand 1, single buffered']
    #allocation5 [shape = 's32[1]{0}', space=sflag, size = 0x4, scoped, tag = 'scoped memory for tpu_custom_call.1']
    %7 = vsyncpa [#allocation3], 0
    %8 = vsyncpa [#allocation5], 0
    // Predicated region
    $region2: #{tpu_custom_call.1} parent=1 // pred_check
      _
    $region3: #{tpu_custom_call.1} parent=1 // pred_check_branch
      %10 = sbr.rel (0) target = $region5
    $region4: #{tpu_custom_call.1} parent=1 // pred_region
      %s12 = ssub.s32 128, 128
      %13 = vsyncadd [#allocation3], %s12
      %s15 = sshll.u32 [#allocation2], 4
      %s16 = int_to_ptr.vmem [resolvable:$true] %s15
      %18 = dma.hbm_to_vmem [thread:$0]  %s0, 128, %s16, [#allocation3]
    $region5: #{tpu_custom_call.1} parent=1 // pred_fallthru
      _
    // Predicated region
    $region6: #{tpu_custom_call.1} parent=1 // pred_check
      _
    $region7: #{tpu_custom_call.1} parent=1 // pred_check_branch
      %20 = sbr.rel (0) target = $region9
    $region8: #{tpu_custom_call.1} parent=1 // pred_region
      %s22 = ssub.s32 32, 32
      %23 = vsyncadd [#allocation5], %s22
      %s25 = sshll.u32 [#allocation4], 4
      %s26 = int_to_ptr.vmem [resolvable:$true] %s25
      %28 = dma.hbm_to_vmem [thread:$0]  %s1, 32, %s26, [#allocation5]
    $region9: #{tpu_custom_call.1} parent=1 // pred_fallthru
      _
    // Predicated region
    $region10: #{tpu_custom_call.1} parent=1 // pred_check
      _
    $region11: #{tpu_custom_call.1} parent=1 // pred_check_branch
      %30 = sbr.rel (0) target = $region13
    $region12: #{tpu_custom_call.1} parent=1 // pred_region
      %31 = dma.done [#allocation3], 128
    $region13: #{tpu_custom_call.1} parent=1 // pred_fallthru
      _
    // Predicated region
    $region14: #{tpu_custom_call.1} parent=1 // pred_check
      _
    $region15: #{tpu_custom_call.1} parent=1 // pred_check_branch
      %33 = sbr.rel (0) target = $region17
    $region16: #{tpu_custom_call.1} parent=1 // pred_region
      %34 = dma.done [#allocation5], 32
    $region17: #{tpu_custom_call.1} parent=1 // pred_fallthru
      _
    %v35 = vld [vmem:[#allocation2] sm:$0xff]
    %v36 = vld [vmem:[#allocation4] sm:$0x3]
    %38 = vset.pattern.permute.xlu0 2
    %39 = vperm.xlu0 %38, %v35
    %v40 = vpop.permute.xlu0 %39
    %v42 = vlaneseq
    %v43 = vshrl.u32 %v42, 7
    %v44 = vsub.s32 0, %v43
    %v45 = vrot.slane %v36, %v44
    %v46 = vmul.f32 %v40, %v45
    %47 = vset.pattern.permute.xlu0 0
    %48 = vperm.xlu0 %47, %v35
    %v49 = vpop.permute.xlu0 %48
    %v51 = vsub.f32 %v49, %v46
    %v52 = vmul.f32 %v51, %v51
    %v53 = vlaneseq
    %v54 = vshrl.u32 %v53, 7
    %v55 = vsub.s32 1, %v54
    %v56 = vrot.slane %v36, %v55
    %v57 = vmul.f32 %v40, %v56
    %58 = vset.pattern.permute.xlu0 1
    %59 = vperm.xlu0 %58, %v35
    %v60 = vpop.permute.xlu0 %59
    %v62 = vsub.f32 %v60, %v57
    %v63 = vmul.f32 %v62, %v62
    %v64 = vadd.f32 %v52, %v63
    %65 = vset.pattern.permute.xlu0 3
    %66 = vperm.xlu0 %65, %v35
    %v67 = vpop.permute.xlu0 %66
    %v69 = vmul.f32 %v67, %v64
    %70 = vmax.xlane.f32.xlu0 %v69
    %v71 = vpop.xlane.xlu0 %70
    %v72 = vsub.f32 %v69, %v71
    %v73 = vmul.f32 %v72, 1.442695
    %v74 = vpow.pop %v73
    %75 = vadd.xlane.f32.xlu0 %v74
    %v76 = vpop.xlane.xlu0 %75
    %v77 = vrcp.pop %v76
    %v78 = vmul.f32 %v76, %v77
    %v79 = vsub.f32 2.0, %v78
    %v80 = vmul.f32 %v77, %v79
    %v81 = vmul.f32 %v74, %v80
    %v82 = vmul.f32 %v81, %v45
    %83 = vadd.xlane.f32.xlu0 %v82
    %v84 = vpop.xlane.xlu0 %83
    %v85 = vmul.f32 %v35, %v84
    %vm86 = vcmp.ne.f32.partialorder %v85, %v85
    %v87 = vsel %vm86, 0.0, %v85
    %88 = vrot.lane.b32.xlu0 %v35, 2
    %v89 = vpop.permute.xlu0 %88
    %v91 = vsub.f32 %v87, %v89
    %92 = vrot.lane.b32.xlu0 %v35, 126
    %v93 = vpop.permute.xlu0 %92
    %v95 = vmul.f32 %v91, %v93
    %97 = vrot.lane.b32.xlu0 %v95, 126
    %v98 = vpop.permute.xlu0 %97
    %vm100 = vcmask 7168
    %101 = vst.msk [vmem:[%s2] sm:$0xff] %vm100, %v98
    %v102 = vmul.f32 %v81, %v56
    %103 = vadd.xlane.f32.xlu0 %v102
    %v104 = vpop.xlane.xlu0 %103
    %v105 = vmul.f32 %v35, %v104
    %vm106 = vcmp.ne.f32.partialorder %v105, %v105
    %v107 = vsel %vm106, 0.0, %v105
    %108 = vrot.lane.b32.xlu0 %v35, 1
    %v109 = vpop.permute.xlu0 %108
    %v111 = vsub.f32 %v107, %v109
    %v112 = vmul.f32 %v111, %v93
    %114 = vrot.lane.b32.xlu0 %v112, 127
    %v115 = vpop.permute.xlu0 %114
    %vm117 = vcmask 15368
    %118 = vst.msk [vmem:[%s2] sm:$0xff] %vm117, %v115
    // Predicated region
    $region18: #{tpu_custom_call.1} parent=1 // pred_check
      _
    $region19: #{tpu_custom_call.1} parent=1 // pred_check_branch
      %120 = sbr.rel (0) target = $region21
    $region20: #{tpu_custom_call.1} parent=1 // pred_region
      _
    $region21: #{tpu_custom_call.1} parent=1 // pred_fallthru
      _
    // Predicated region
    $region22: #{tpu_custom_call.1} parent=1 // pred_check
      _
    $region23: #{tpu_custom_call.1} parent=1 // pred_check_branch
      %122 = sbr.rel (0) target = $region25
    $region24: #{tpu_custom_call.1} parent=1 // pred_region
      _
    $region25: #{tpu_custom_call.1} parent=1 // pred_fallthru
      _
    %123 = vsyncpa [#allocation3], 1
    %124 = vsyncpa [#allocation5], 1

</llo_original>
